<compile_context>
chip_gen: v7x
topology: tpu7x:2x2x1
jax: 0.10.0
libtpu: 0.0.40
codegen_flags: <defaults>
</compile_context>

<pallas_src>
import math
import functools

import jax
import jax.numpy as jnp
from jax import lax
from jax.experimental import pallas as pl
from jax.experimental.pallas import tpu as pltpu


def _mdh_metric_kernel(ubt_ref, u_ref, st_ref, acc_ref, *,
                       m_total, tm, tc, n_chunks):
    """Accumulates sum over the tile of  softplus(theta) - S * theta  (un-normalized)."""
    m = pl.program_id(0)

    @pl.when(m == 0)
    def _init():
        acc_ref[...] = jnp.zeros_like(acc_ref)

    ubt = ubt_ref[...]                                   # (B, K) resident codes
    lane = lax.broadcasted_iota(jnp.int32, acc_ref.shape, 1)   # (B, tc), hoisted once
    col_base = m * tm

    acc = jnp.zeros(acc_ref.shape, jnp.float32)
    for j in range(n_chunks):                            # static; ref slices are free views
        u_c = u_ref[:, j * tc:(j + 1) * tc]                      # (K, tc)
        s_c = st_ref[:, j * tc:(j + 1) * tc].astype(jnp.float32)  # (B, tc)

        # Lane-dense MXU output: theta^T chunk == (U.T @ U_batch / 2).T chunk.
        theta = jnp.dot(ubt, u_c, preferred_element_type=jnp.float32) * 0.5
        theta = jnp.clip(theta, -100.0, 50.0)
        # Numerically stable softplus == log(1 + exp(theta)).
        softplus = jnp.maximum(theta, 0.0) + jnp.log(1.0 + jnp.exp(-jnp.abs(theta)))
        contrib = softplus - s_c * theta

        # Mask columns past the true database size M (the partial tail tile's
        # VMEM holds stale/garbage data; keep this mask — the wrapper does NOT pad).
        valid = lane < (m_total - col_base - j * tc)
        acc = acc + jnp.where(valid, contrib, 0.0)

    acc_ref[...] += acc


def mdh_loss(U_batch, U, S, C, N, eta1, eta2, eta3, *,
             tm=32768, tc=512, s_dtype=None):
    K, B = U_batch.shape
    K2, M = U.shape
    assert K2 == K, "U_batch and U must share the code-bit dimension"

    # S: PyTorch layout is (M, B).  A pre-transposed (B, M) S is also accepted
    # and avoids one extra HBM pass here.
    if S.shape == (M, B):
        st = S.T
    elif S.shape == (B, M):
        st = S
    else:
        raise ValueError(f"S has shape {S.shape}, expected {(M, B)} or {(B, M)}")
    if s_dtype is not None:
        # Opt-in: only exact for exactly representable similarities (e.g. 0/1 labels).
        st = st.astype(s_dtype)

    def rdown(x, mult):
        return max(mult, (int(x) // mult) * mult)

    # Tile-size derivation: lane multiples of 128, clamped by the database size
    # and by a ~24 MiB double-buffered stream budget (safe for v7x's 64 MiB VMEM
    # while leaving headroom; far under v5e/v6e's 128 MiB).
    tc = rdown(tc, 128)
    m_pad128 = int(pl.cdiv(M, 128)) * 128
    bytes_per_col = K * U.dtype.itemsize + B * st.dtype.itemsize
    vmem_budget = 24 * 1024 * 1024
    tm_budget = rdown(vmem_budget // (2 * bytes_per_col), 128)
    tm = rdown(min(int(tm), m_pad128, tm_budget), 128)
    tc = min(tc, tm)
    tm = rdown(tm, tc)                 # tm is a multiple of tc
    n_chunks = tm // tc
    n_tiles = int(pl.cdiv(M, tm))

    kernel = functools.partial(
        _mdh_metric_kernel, m_total=int(M), tm=tm, tc=tc, n_chunks=n_chunks)

    cost = pl.CostEstimate(
        flops=int(2 * B * K * n_tiles * tm),
        transcendentals=int(2 * B * n_tiles * tm),
        bytes_accessed=int(K * M * U.dtype.itemsize + B * M * st.dtype.itemsize
                           + B * K * U_batch.dtype.itemsize + B * tc * 4))

    grid_spec = pltpu.PrefetchScalarGridSpec(
        num_scalar_prefetch=0,
        grid=(n_tiles,),
        in_specs=[
            pl.BlockSpec((B, K), lambda m: (0, 0)),     # U_batch^T (resident, tiny)
            pl.BlockSpec((K, tm), lambda m: (0, m)),    # U tile stream (native dtype)
            pl.BlockSpec((B, tm), lambda m: (0, m)),    # S^T tile stream
        ],
        out_specs=pl.BlockSpec((B, tc), lambda m: (0, 0)),  # resident vreg accumulator
    )

    partial_sums = pl.pallas_call(
        kernel,
        out_shape=jax.ShapeDtypeStruct((B, tc), jnp.float32),
        grid_spec=grid_spec,
        compiler_params=pltpu.CompilerParams(
            dimension_semantics=("arbitrary",),
            vmem_limit_bytes=32 * 1024 * 1024),
        cost_estimate=cost,
    )(U_batch.T, U, st)

    # Single cross-lane reduction + normalization in plain JAX (tiny).
    metric_loss = jnp.sum(partial_sums) / (float(M) * float(B))

    # Quantization terms depend only on the tiny (K, B) U_batch: plain JAX.
    ub = U_batch.astype(jnp.float32)
    multip = ub @ ub.T                                   # (K, K)
    fi1 = float(C) * float(N) - 2.0 * jnp.trace(multip)
    fi2 = jnp.sum(ub) ** 2
    fi3 = jnp.mean(multip * multip) - float(N) * math.sqrt(float(C))
    quantization_loss = eta1 * fi1 + eta2 * fi2 + eta3 * fi3

    return metric_loss + quantization_loss


def mdh_loss_ref(U_batch, U, S, C, N, eta1, eta2, eta3):
    """Pure-JAX reference mirroring the PyTorch forward (f32)."""
    ub = U_batch.astype(jnp.float32)
    uf = U.astype(jnp.float32)
    sf = S.astype(jnp.float32)
    theta = (uf.T @ ub) / 2.0
    theta = jnp.clip(theta, -100.0, 50.0)
    metric_loss = jnp.mean(jnp.log(1.0 + jnp.exp(theta)) - sf * theta)
    multip = ub @ ub.T
    fi1B = C * N - jnp.trace(2.0 * multip)
    fi2B = jnp.sum(ub) ** 2
    fi3B = jnp.mean(multip ** 2) - N * math.sqrt(C)
    return metric_loss + eta1 * fi1B + eta2 * fi2B + eta3 * fi3B


if __name__ == "__main__":
    # Hyperparameters (module __init__ args) -- deterministic, in-script.
    eta1, eta2, eta3 = 0.01, 0.01, 0.01

    # Small shapes: K code bits, B batch, M database items.  M is not a multiple
    # of any tile/chunk size so partial-tile masking is exercised.
    K, B, M = 32, 8, 300
    C, N = float(K), float(B)

    key = jax.random.PRNGKey(0)
    k1, k2, k3 = jax.random.split(key, 3)
    U_batch = jnp.sign(jax.random.normal(k1, (K, B), dtype=jnp.float32))
    U = jnp.sign(jax.random.normal(k2, (K, M), dtype=jnp.float32))
    S = jax.random.bernoulli(k3, p=0.5, shape=(M, B)).astype(jnp.float32)

    ref = mdh_loss_ref(U_batch, U, S, C, N, eta1, eta2, eta3)

    configs = [
        dict(),                                          # defaults: one big (clamped) tile
        dict(tm=128, tc=128, s_dtype=jnp.bfloat16),      # multi-tile grid + partial tail + narrow S
        dict(tm=384, tc=128),                            # multi-chunk inner loop in one tile
    ]
    for cfg in configs:
        loss = mdh_loss(U_batch, U, S, C, N, eta1, eta2, eta3, **cfg)
        jax.block_until_ready(loss)
        assert jnp.allclose(loss, ref, rtol=1e-4, atol=1e-3), (cfg, loss, ref)

    # bf16 +/-1 codes streamed natively (no wrapper cast pass) -- exact for sign codes.
    loss_bf16 = mdh_loss(U_batch.astype(jnp.bfloat16), U.astype(jnp.bfloat16), S,
                         C, N, eta1, eta2, eta3, tm=256, tc=128)
    jax.block_until_ready(loss_bf16)
    assert jnp.allclose(loss_bf16, ref, rtol=1e-4, atol=1e-3), (loss_bf16, ref)

    print("KERNEL_OK")
</pallas_src>

<mosaic_0001>
module attributes {stable_mosaic.version = 11 : i64} {
  func.func @_mdh_metric_kernel(%arg0: i32, %arg1: memref<8x32xf32, #tpu.memory_space<vmem>>, %arg2: memref<32x384xf32, #tpu.memory_space<vmem>>, %arg3: memref<8x384xf32, #tpu.memory_space<vmem>>, %arg4: memref<8x384xf32, #tpu.memory_space<vmem>>) attributes {dimension_semantics = [#tpu.dimension_semantics<arbitrary>], iteration_bounds = array<i64: 1>, scalar_prefetch = 0 : i64, scratch_operands = 0 : i64, tpu.core_type = #tpu.core_type<tc>, window_params = [{pipeline_mode = #tpu.pipeline_mode<synchronous>, transform_indices = @transform_0, window_bounds = array<i64: 8, 32>}, {transform_indices = @transform_1, window_bounds = array<i64: 32, 384>}, {transform_indices = @transform_2, window_bounds = array<i64: 8, 384>}, {pipeline_mode = #tpu.pipeline_mode<synchronous>, transform_indices = @transform_3, window_bounds = array<i64: 8, 384>}]} {
    %c0_i32 = arith.constant 0 : i32
    %0 = arith.cmpi eq, %arg0, %c0_i32 : i32
    %1 = arith.extui %0 : i1 to i32
    %c0_i32_0 = arith.constant 0 : i32
    %2 = arith.cmpi ne, %1, %c0_i32_0 : i32
    scf.if %2 {
      %cst_19 = arith.constant 0.000000e+00 : f32
      %38 = vector.broadcast %cst_19 : f32 to vector<8x384xf32>
      %c0_20 = arith.constant 0 : index
      %c0_21 = arith.constant 0 : index
      %39 = vector.load %arg4[%c0_20, %c0_21] : memref<8x384xf32, #tpu.memory_space<vmem>>, vector<8x384xf32>
      tpu.vector_store %arg4[%c0_20, %c0_21], %38 {strides = array<i32>} : memref<8x384xf32, #tpu.memory_space<vmem>>, vector<8x384xf32>,
    } else {
    }
    %c0 = arith.constant 0 : index
    %c0_1 = arith.constant 0 : index
    %3 = vector.load %arg1[%c0, %c0_1] : memref<8x32xf32, #tpu.memory_space<vmem>>, vector<8x32xf32>
    %4 = tpu.iota {dimensions = array<i32: 1>} : vector<8x384xi32>
    %c384_i32 = arith.constant 384 : i32
    %5 = arith.muli %arg0, %c384_i32 : i32
    %cst = arith.constant 0.000000e+00 : f32
    %6 = vector.broadcast %cst : f32 to vector<8x384xf32>
    %c0_2 = arith.constant 0 : index
    %c0_3 = arith.constant 0 : index
    %7 = vector.load %arg2[%c0_2, %c0_3] : memref<32x384xf32, #tpu.memory_space<vmem>>, vector<32x384xf32>
    %c0_4 = arith.constant 0 : index
    %c0_5 = arith.constant 0 : index
    %8 = vector.load %arg3[%c0_4, %c0_5] : memref<8x384xf32, #tpu.memory_space<vmem>>, vector<8x384xf32>
    %cst_6 = arith.constant dense<0.000000e+00> : vector<8x384xf32>
    %9 = tpu.matmul %3, %7, %cst_6 {dimension_numbers = #tpu.dot_dimension_numbers<[1], [0], [0], [1], [0, 0, 1, 1], [], []>} : vector<8x32xf32>, vector<32x384xf32>, vector<8x384xf32> -> vector<8x384xf32>
    %cst_7 = arith.constant 5.000000e-01 : f32
    %10 = vector.broadcast %cst_7 : f32 to vector<8x384xf32>
    %11 = arith.mulf %9, %10 : vector<8x384xf32>
    %cst_8 = arith.constant -1.000000e+02 : f32
    %cst_9 = arith.constant 5.000000e+01 : f32
    %12 = vector.broadcast %cst_8 : f32 to vector<8x384xf32>
    %13 = arith.maximumf %12, %11 : vector<8x384xf32>
    %14 = vector.broadcast %cst_9 : f32 to vector<8x384xf32>
    %15 = arith.minimumf %14, %13 : vector<8x384xf32>
    %cst_10 = arith.constant 0.000000e+00 : f32
    %16 = vector.broadcast %cst_10 : f32 to vector<8x384xf32>
    %17 = arith.maximumf %15, %16 : vector<8x384xf32>
    %18 = math.absf %15 : vector<8x384xf32>
    %cst_11 = arith.constant 0.000000e+00 : f32
    %19 = vector.broadcast %cst_11 : f32 to vector<8x384xf32>
    %20 = arith.subf %19, %18 : vector<8x384xf32>
    %21 = math.exp %20 : vector<8x384xf32>
    %cst_12 = arith.constant 1.000000e+00 : f32
    %22 = vector.broadcast %cst_12 : f32 to vector<8x384xf32>
    %23 = arith.addf %22, %21 : vector<8x384xf32>
    %24 = math.log %23 : vector<8x384xf32>
    %25 = arith.addf %17, %24 : vector<8x384xf32>
    %26 = arith.mulf %8, %15 : vector<8x384xf32>
    %27 = arith.subf %25, %26 : vector<8x384xf32>
    %c300_i32 = arith.constant 300 : i32
    %28 = arith.subi %c300_i32, %5 : i32
    %c0_i32_13 = arith.constant 0 : i32
    %29 = arith.subi %28, %c0_i32_13 : i32
    %30 = vector.broadcast %29 : i32 to vector<8x384xi32>
    %31 = arith.cmpi slt, %4, %30 : vector<8x384xi32>
    %cst_14 = arith.constant 0.000000e+00 : f32
    %32 = vector.broadcast %cst_14 : f32 to vector<8x384xf32>
    %33 = arith.select %31, %27, %32 : vector<8x384xi1>, vector<8x384xf32>
    %34 = arith.addf %6, %33 : vector<8x384xf32>
    %c0_15 = arith.constant 0 : index
    %c0_16 = arith.constant 0 : index
    %35 = vector.load %arg4[%c0_15, %c0_16] : memref<8x384xf32, #tpu.memory_space<vmem>>, vector<8x384xf32>
    %36 = arith.addf %35, %34 : vector<8x384xf32>
    %c0_17 = arith.constant 0 : index
    %c0_18 = arith.constant 0 : index
    %37 = vector.load %arg4[%c0_17, %c0_18] : memref<8x384xf32, #tpu.memory_space<vmem>>, vector<8x384xf32>
    tpu.vector_store %arg4[%c0_17, %c0_18], %36 {strides = array<i32>} : memref<8x384xf32, #tpu.memory_space<vmem>>, vector<8x384xf32>,
    return
  }
  func.func @transform_0(%arg0: i32) -> (i32, i32) {
    %c0_i32 = arith.constant 0 : i32
    %c0_i32_0 = arith.constant 0 : i32
    %c0_i32_1 = arith.constant 0 : i32
    return %c0_i32, %c0_i32_0 : i32, i32
  }
  func.func @transform_1(%arg0: i32) -> (i32, i32) {
    %c0_i32 = arith.constant 0 : i32
    %c0_i32_0 = arith.constant 0 : i32
    return %c0_i32, %arg0 : i32, i32
  }
  func.func @transform_2(%arg0: i32) -> (i32, i32) {
    %c0_i32 = arith.constant 0 : i32
    %c0_i32_0 = arith.constant 0 : i32
    return %c0_i32, %arg0 : i32, i32
  }
  func.func @transform_3(%arg0: i32) -> (i32, i32) {
    %c0_i32 = arith.constant 0 : i32
    %c0_i32_0 = arith.constant 0 : i32
    %c0_i32_1 = arith.constant 0 : i32
    return %c0_i32, %c0_i32_0 : i32, i32
  }
}

</mosaic_0001>

<llo_original>
// kernel: tpu_custom_call.1
$region0: #{tpu_custom_call.1}
  #allocation0 [shape = 'u32[]', space=smem, size = 0x4, offset = 0x4, fixed_abs, tag = 'smem constant byte address 0x4 - core index']
  #allocation1 [shape = 'u32[144,128]{1,0:T(1,128)}', space=vmem, size = 0x12000, scoped, tag = 'internal scratch']
  %s0 = inlined_call_operand.hbm [shape: f32[8,32], index: 0, kind: input, shape index: {}]
  %s1 = inlined_call_operand.hbm [shape: f32[32,300], index: 1, kind: input, shape index: {}]
  %s2 = inlined_call_operand.hbm [shape: f32[8,300], index: 2, kind: input, shape index: {}]
  %s3 = inlined_call_operand.hbm [shape: f32[8,384], index: 3, kind: output, shape index: {}]
  %s4 = sld [smem:[#allocation0]]
  $region38: #{tpu_custom_call.1} parent=0
    _
  %s6 = ssub.s32 1, %s4
  %s7 = scalar_select 0, %s6, %s4
  $region1: #{tpu_custom_call.1} parent=0
    #allocation2 [shape = 'u8[4096]{0}', space=vmem, size = 0x1000, scoped, tag = 'input window, operand 0, single buffered']
    #allocation3 [shape = 's32[1]{0}', space=sflag, size = 0x4, scoped, tag = 'scoped memory for tpu_custom_call.1']
    #allocation4 [shape = 's32[1]{0}', space=sflag, size = 0x4, scoped, tag = 'scoped memory for tpu_custom_call.1']
    #allocation5 [shape = 'u8[49152]{0}', space=vmem, size = 0xc000, scoped, tag = 'input window, operand 1, single buffered']
    #allocation6 [shape = 's32[1]{0}', space=sflag, size = 0x4, scoped, tag = 'scoped memory for tpu_custom_call.1']
    #allocation7 [shape = 'u8[12288]{0}', space=vmem, size = 0x3000, scoped, tag = 'input window, operand 2, single buffered']
    #allocation8 [shape = 'u8[12288]{0}', space=vmem, size = 0x3000, scoped, tag = 'output window, operand 0, single buffered']
    %8 = vsyncpa [#allocation3], 0
    %9 = vsyncpa [#allocation6], 0
    %10 = vsyncpa [#allocation4], 0
    // Predicated region
    $region2: #{tpu_custom_call.1} parent=1 // pred_check
      _
    $region3: #{tpu_custom_call.1} parent=1 // pred_check_branch
      %12 = sbr.rel (0) target = $region5
    $region4: #{tpu_custom_call.1} parent=1 // pred_region
      %s14 = ssub.s32 128, 128
      %15 = vsyncadd [#allocation3], %s14
      %s17 = sshll.u32 [#allocation2], 4
      %s18 = int_to_ptr.vmem [resolvable:$true] %s17
      %20 = dma.hbm_to_vmem [thread:$0]  %s0, 128, %s18, [#allocation3]
    $region5: #{tpu_custom_call.1} parent=1 // pred_fallthru
      _
    // Predicated region
    $region6: #{tpu_custom_call.1} parent=1 // pred_check
      _
    $region7: #{tpu_custom_call.1} parent=1 // pred_check_branch
      %22 = sbr.rel (0) target = $region9
    $region8: #{tpu_custom_call.1} parent=1 // pred_region
      %s24 = ssub.s32 1536, 1536
      %25 = vsyncadd [#allocation6], %s24
      %s26 = sshll.u32 [#allocation5], 4
      %s27 = int_to_ptr.vmem [resolvable:$true] %s26
      %32 = dma.hbm_to_vmem [thread:$0]  %s1, 1536, %s27, [#allocation6], 384, 384, 24
    $region9: #{tpu_custom_call.1} parent=1 // pred_fallthru
      _
    // Predicated region
    $region10: #{tpu_custom_call.1} parent=1 // pred_check
      _
    $region11: #{tpu_custom_call.1} parent=1 // pred_check_branch
      %34 = sbr.rel (0) target = $region13
    $region12: #{tpu_custom_call.1} parent=1 // pred_region
      %s36 = ssub.s32 384, 384
      %37 = vsyncadd [#allocation6], %s36
      %s39 = sshll.u32 [#allocation7], 4
      %s40 = int_to_ptr.vmem [resolvable:$true] %s39
      %42 = dma.hbm_to_vmem [thread:$0]  %s2, 384, %s40, [#allocation6]
    $region13: #{tpu_custom_call.1} parent=1 // pred_fallthru
      _
    // Predicated region
    $region14: #{tpu_custom_call.1} parent=1 // pred_check
      _
    $region15: #{tpu_custom_call.1} parent=1 // pred_check_branch
      %44 = sbr.rel (0) target = $region17
    $region16: #{tpu_custom_call.1} parent=1 // pred_region
      %45 = dma.done [#allocation3], 128
    $region17: #{tpu_custom_call.1} parent=1 // pred_fallthru
      _
    // Predicated region
    $region18: #{tpu_custom_call.1} parent=1 // pred_check
      _
    $region19: #{tpu_custom_call.1} parent=1 // pred_check_branch
      %47 = sbr.rel (0) target = $region21
    $region20: #{tpu_custom_call.1} parent=1 // pred_region
      %48 = dma.done [#allocation6], 1536
    $region21: #{tpu_custom_call.1} parent=1 // pred_fallthru
      _
    // Predicated region
    $region22: #{tpu_custom_call.1} parent=1 // pred_check
      _
    $region23: #{tpu_custom_call.1} parent=1 // pred_check_branch
      %50 = sbr.rel (0) target = $region25
    $region24: #{tpu_custom_call.1} parent=1 // pred_region
      %51 = dma.done [#allocation6], 384
    $region25: #{tpu_custom_call.1} parent=1 // pred_fallthru
      _
    %p52 = scmp.eq.s32.totalorder 0, 0
    // Predicated region
    $region26: #{tpu_custom_call.1} parent=1 // pred_check
      %p53 = pneg %p52
    $region27: #{tpu_custom_call.1} parent=1 // pred_check_branch
      %55 = sbr.rel (%p53) target = $region29
    $region28: #{tpu_custom_call.1} parent=1 // pred_region
      %56 = vst [vmem:[#allocation8] sm:$0xff] 0.0
      %57 = vst [vmem:[#allocation8 + $0x8] sm:$0xff] 0.0
      %58 = vst [vmem:[#allocation8 + $0x10] sm:$0xff] 0.0
    $region29: #{tpu_custom_call.1} parent=1 // pred_fallthru
      _
    %v59 = vld [vmem:[#allocation2] sm:$0xff]
    %v60 = vlaneseq
    %v61 = vand.u32 %v60, 127
    %v62 = vadd.s32 %v61, 128
    %v63 = vadd.s32 %v61, 256
    %s64 = smul.u32 0, 384
    %v65 = vld [vmem:[#allocation5] sm:$0xff]
    %v66 = vld [vmem:[#allocation5 + $0x8] sm:$0xff]
    %v67 = vld [vmem:[#allocation5 + $0x10] sm:$0xff]
    %v68 = vld [vmem:[#allocation5 + $0x18] sm:$0xff]
    %v69 = vld [vmem:[#allocation5 + $0x20] sm:$0xff]
    %v70 = vld [vmem:[#allocation5 + $0x28] sm:$0xff]
    %v71 = vld [vmem:[#allocation5 + $0x30] sm:$0xff]
    %v72 = vld [vmem:[#allocation5 + $0x38] sm:$0xff]
    %v73 = vld [vmem:[#allocation5 + $0x40] sm:$0xff]
    %v74 = vld [vmem:[#allocation5 + $0x48] sm:$0xff]
    %v75 = vld [vmem:[#allocation5 + $0x50] sm:$0xff]
    %v76 = vld [vmem:[#allocation5 + $0x58] sm:$0xff]
    %v77 = vld [vmem:[#allocation7] sm:$0xff]
    %v78 = vld [vmem:[#allocation7 + $0x8] sm:$0xff]
    %v79 = vld [vmem:[#allocation7 + $0x10] sm:$0xff]
    %vm80 = vcmask 261120
    %v82 = vsel %vm80, %v59, 0
    %84 = vmatprep.subr.mxu0 %v66
    %85 = vmatpush1.msra.mxu0 %v65
    %86 = vmatprep.subr.mxu0 %v69
    %87 = vmatpush1.msra.mxu0 %v68
    %88 = vmatprep.subr.mxu0 %v72
    %89 = vmatpush1.msra.mxu0 %v71
    %90 = vmatprep.subr.mxu0 %v75
    %91 = vmatpush1.msra.mxu0 %v74
    %92 = vmatprep.subr.mxu0 0.0
    %93 = vmatpush1.msra.mxu0 0.0
    %94 = vmatprep.subr.mxu0 0.0
    %95 = vmatpush1.msra.mxu0 0.0
    %96 = vmatprep.subr.mxu0 0.0
    %97 = vmatpush1.msra.mxu0 0.0
    %98 = vmatprep.subr.mxu0 0.0
    %99 = vmatpush1.msra.mxu0 0.0
    %100 = vmatprep.subr.mxu0 0.0
    %101 = vmatpush1.msra.mxu0 0.0
    %102 = vmatprep.subr.mxu0 0.0
    %103 = vmatpush1.msra.mxu0 0.0
    %104 = vmatprep.subr.mxu0 0.0
    %105 = vmatpush1.msra.mxu0 0.0
    %106 = vmatprep.subr.mxu0 0.0
    %107 = vmatpush1.msra.mxu0 0.0
    %108 = vmatprep.subr.mxu0 0.0
    %109 = vmatpush1.msra.mxu0 0.0
    %110 = vmatprep.subr.mxu0 0.0
    %111 = vmatpush1.msra.mxu0 0.0
    %112 = vmatprep.subr.mxu0 0.0
    %113 = vmatpush1.msra.mxu0 0.0
    %114 = vmatprep.subr.mxu0 0.0
    %115 = vmatpush1.msra.mxu0 0.0
    %116 = vmatprep.subr.mxu0 0.0
    %117 = vmatpush1.msra.mxu0 0.0
    %118 = vmatprep.subr.mxu0 0.0
    %119 = vmatpush1.msra.mxu0 0.0
    %120 = vmatprep.subr.mxu0 0.0
    %121 = vmatpush1.msra.mxu0 0.0
    %122 = vmatprep.subr.mxu0 0.0
    %123 = vmatpush1.msra.mxu0 0.0
    %124 = vmatprep.subr.mxu0 0.0
    %125 = vmatpush1.msra.mxu0 0.0
    %126 = vmatprep.subr.mxu0 0.0
    %127 = vmatpush1.msra.mxu0 0.0
    %128 = vmatprep.subr.mxu0 0.0
    %129 = vmatpush1.msra.mxu0 0.0
    %130 = vmatprep.subr.mxu0 0.0
    %131 = vmatpush1.msra.mxu0 0.0
    %132 = vmatprep.subr.mxu0 0.0
    %133 = vmatpush1.msra.mxu0 0.0
    %134 = vmatprep.subr.mxu0 0.0
    %135 = vmatpush1.msra.mxu0 0.0
    %136 = vmatprep.subr.mxu0 0.0
    %137 = vmatpush1.msra.mxu0 0.0
    %138 = vmatprep.subr.mxu0 0.0
    %139 = vmatpush1.msra.mxu0 0.0
    %140 = vmatprep.subr.mxu0 0.0
    %141 = vmatpush1.msra.mxu0 0.0
    %142 = vmatprep.subr.mxu0 0.0
    %143 = vmatpush1.msra.mxu0 0.0
    %144 = vmatprep.subr.mxu0 0.0
    %145 = vmatpush1.msra.mxu0 0.0
    %146 = vmatprep.subr.mxu0 0.0
    %147 = vmatpush1.msra.mxu0 0.0
    %148 = vmatprep.mubr.f32.mxu0 0.0
    %149 = vmatmul.mubr.f32.gmra.mrb[0].mxu0 %v82
    %v150 = vpop.f32.mrb[0].mxu0
    %v151 = vadd.f32 0.0, %v150
    %v152 = vpop.f32.mrb[0].mxu0
    %v153 = vadd.f32 0.0, %v152
    %154 = vdwg.mxu0
    %155 = vmatprep.subr.mxu0 0.0
    %156 = vmatpush1.msra.mxu0 %v67
    %157 = vmatprep.subr.mxu0 0.0
    %158 = vmatpush1.msra.mxu0 %v70
    %159 = vmatprep.subr.mxu0 0.0
    %160 = vmatpush1.msra.mxu0 %v73
    %161 = vmatprep.subr.mxu0 0.0
    %162 = vmatpush1.msra.mxu0 %v76
    %163 = vmatprep.subr.mxu0 0.0
    %164 = vmatpush1.msra.mxu0 0.0
    %165 = vmatprep.subr.mxu0 0.0
    %166 = vmatpush1.msra.mxu0 0.0
    %167 = vmatprep.subr.mxu0 0.0
    %168 = vmatpush1.msra.mxu0 0.0
    %169 = vmatprep.subr.mxu0 0.0
    %170 = vmatpush1.msra.mxu0 0.0
    %171 = vmatprep.subr.mxu0 0.0
    %172 = vmatpush1.msra.mxu0 0.0
    %173 = vmatprep.subr.mxu0 0.0
    %174 = vmatpush1.msra.mxu0 0.0
    %175 = vmatprep.subr.mxu0 0.0
    %176 = vmatpush1.msra.mxu0 0.0
    %177 = vmatprep.subr.mxu0 0.0
    %178 = vmatpush1.msra.mxu0 0.0
    %179 = vmatprep.subr.mxu0 0.0
    %180 = vmatpush1.msra.mxu0 0.0
    %181 = vmatprep.subr.mxu0 0.0
    %182 = vmatpush1.msra.mxu0 0.0
    %183 = vmatprep.subr.mxu0 0.0
    %184 = vmatpush1.msra.mxu0 0.0
    %185 = vmatprep.subr.mxu0 0.0
    %186 = vmatpush1.msra.mxu0 0.0
    %187 = vmatprep.subr.mxu0 0.0
    %188 = vmatpush1.msra.mxu0 0.0
    %189 = vmatprep.subr.mxu0 0.0
    %190 = vmatpush1.msra.mxu0 0.0
    %191 = vmatprep.subr.mxu0 0.0
    %192 = vmatpush1.msra.mxu0 0.0
    %193 = vmatprep.subr.mxu0 0.0
    %194 = vmatpush1.msra.mxu0 0.0
    %195 = vmatprep.subr.mxu0 0.0
    %196 = vmatpush1.msra.mxu0 0.0
    %197 = vmatprep.subr.mxu0 0.0
    %198 = vmatpush1.msra.mxu0 0.0
    %199 = vmatprep.subr.mxu0 0.0
    %200 = vmatpush1.msra.mxu0 0.0
    %201 = vmatprep.subr.mxu0 0.0
    %202 = vmatpush1.msra.mxu0 0.0
    %203 = vmatprep.subr.mxu0 0.0
    %204 = vmatpush1.msra.mxu0 0.0
    %205 = vmatprep.subr.mxu0 0.0
    %206 = vmatpush1.msra.mxu0 0.0
    %207 = vmatprep.subr.mxu0 0.0
    %208 = vmatpush1.msra.mxu0 0.0
    %209 = vmatprep.subr.mxu0 0.0
    %210 = vmatpush1.msra.mxu0 0.0
    %211 = vmatprep.subr.mxu0 0.0
    %212 = vmatpush1.msra.mxu0 0.0
    %213 = vmatprep.subr.mxu0 0.0
    %214 = vmatpush1.msra.mxu0 0.0
    %215 = vmatprep.subr.mxu0 0.0
    %216 = vmatpush1.msra.mxu0 0.0
    %217 = vmatprep.subr.mxu0 0.0
    %218 = vmatpush1.msra.mxu0 0.0
    %219 = vmatprep.mubr.f32.mxu0 0.0
    %220 = vmatmul.mubr.f32.gmra.mrb[0].mxu0 %v82
    %v221 = vpop.f32.mrb[0].mxu0
    %v222 = vadd.f32 0.0, %v221
    %v223 = vpop.f32.mrb[0].mxu0
    %224 = vdwg.mxu0
    %v225 = vmul.f32 %v151, 0.5
    %v226 = vmul.f32 %v153, 0.5
    %v227 = vmul.f32 %v222, 0.5
    %v228 = vmax.f32 %v225, -100.0
    %v229 = vmax.f32 %v226, -100.0
    %v230 = vmax.f32 %v227, -100.0
    %v231 = vmin.f32 %v228, 50.0
    %v232 = vmin.f32 %v229, 50.0
    %v233 = vmin.f32 %v230, 50.0
    %v234 = vmax.f32 %v231, 0.0
    %v235 = vmax.f32 %v232, 0.0
    %v236 = vmax.f32 %v233, 0.0
    %v237 = vand.u32 2147483647, %v231
    %v238 = vand.u32 2147483647, %v232
    %v239 = vand.u32 2147483647, %v233
    %v240 = vsub.f32 0.0, %v237
    %v241 = vsub.f32 0.0, %v238
    %v242 = vsub.f32 0.0, %v239
    %v243 = vmul.f32 %v240, 1.442695
    %v244 = vpow.pop %v243
    %v245 = vmul.f32 %v241, 1.442695
    %v246 = vpow.pop %v245
    %v247 = vmul.f32 %v242, 1.442695
    %v248 = vpow.pop %v247
    %v249 = vadd.f32 %v244, 1.0
    %v250 = vadd.f32 %v246, 1.0
    %v251 = vadd.f32 %v248, 1.0
    %v252 = vlog2.pop %v249
    %v253 = vmul.f32 %v252, 0.6931472
    %v254 = vlog2.pop %v250
    %v255 = vmul.f32 %v254, 0.6931472
    %v256 = vlog2.pop %v251
    %v257 = vmul.f32 %v256, 0.6931472
    %v258 = vadd.f32 %v234, %v253
    %v259 = vadd.f32 %v235, %v255
    %v260 = vadd.f32 %v236, %v257
    %v261 = vmul.f32 %v77, %v231
    %v262 = vmul.f32 %v78, %v232
    %v263 = vmul.f32 %v79, %v233
    %v264 = vsub.f32 %v258, %v261
    %v265 = vsub.f32 %v259, %v262
    %v266 = vsub.f32 %v260, %v263
    %s267 = ssub.s32 300, %s64
    %v268 = vstv %s267
    %vm269 = vcmp.lt.s32.totalorder %v61, %v268
    %vm270 = vcmp.lt.s32.totalorder %v62, %v268
    %vm271 = vcmp.lt.s32.totalorder %v63, %v268
    %v272 = vsel %vm269, %v264, 0.0
    %v273 = vsel %vm270, %v265, 0.0
    %v274 = vsel %vm271, %v266, 0.0
    %v275 = vadd.f32 %v272, 0.0
    %v276 = vadd.f32 %v273, 0.0
    %v277 = vadd.f32 %v274, 0.0
    %v278 = vld [vmem:[#allocation8] sm:$0xff]
    %v279 = vld [vmem:[#allocation8 + $0x8] sm:$0xff]
    %v280 = vld [vmem:[#allocation8 + $0x10] sm:$0xff]
    %v281 = vadd.f32 %v278, %v275
    %v282 = vadd.f32 %v279, %v276
    %v283 = vadd.f32 %v280, %v277
    %284 = vst [vmem:[#allocation8] sm:$0xff] %v281
    %285 = vst [vmem:[#allocation8 + $0x8] sm:$0xff] %v282
    %286 = vst [vmem:[#allocation8 + $0x10] sm:$0xff] %v283
    // Predicated region
    $region30: #{tpu_custom_call.1} parent=1 // pred_check
      _
    $region31: #{tpu_custom_call.1} parent=1 // pred_check_branch
      %288 = sbr.rel (0) target = $region33
    $region32: #{tpu_custom_call.1} parent=1 // pred_region
      %s290 = ssub.s32 384, 384
      %291 = vsyncadd [#allocation4], %s290
      %s293 = sshll.u32 [#allocation8], 4
      %s294 = int_to_ptr.vmem [resolvable:$true] %s293
      %296 = dma.vmem_to_hbm [thread:$0]  %s294, 384, %s3, [#allocation4]
    $region33: #{tpu_custom_call.1} parent=1 // pred_fallthru
      _
    // Predicated region
    $region34: #{tpu_custom_call.1} parent=1 // pred_check
      _
    $region35: #{tpu_custom_call.1} parent=1 // pred_check_branch
      %298 = sbr.rel (0) target = $region37
    $region36: #{tpu_custom_call.1} parent=1 // pred_region
      %299 = dma.done [#allocation4], 384
    $region37: #{tpu_custom_call.1} parent=1 // pred_fallthru
      _
    %300 = vsyncpa [#allocation3], 1
    %301 = vsyncpa [#allocation6], 1
    %302 = vsyncpa [#allocation4], 1

</llo_original>
